<compile_context>
chip_gen: v6e
topology: v6e:2x2x1
jax: 0.10.0
libtpu: 0.0.40
codegen_flags: <defaults>
</compile_context>

<pallas_src>
import jax
import jax.numpy as jnp
from jax import lax
from jax.experimental import pallas as pl
from jax.experimental.pallas import tpu as pltpu

LN_EPS = 1e-3


# --------------------------------------------------------------------------
# Kernel body
# --------------------------------------------------------------------------
def _make_mlp_layernorm_kernel(num_layers, ln_eps, matmul_dtype):
    """Builds the fused kernel body for a fixed number of layers."""

    def kernel(x_ref, *refs):
        # refs = (W0, gamma0, beta0, W1, gamma1, beta1, ..., out_ref)
        out_ref = refs[-1]
        p = refs[:-1]

        h = x_ref[...]                                  # already matmul_dtype (pre-cast)
        for l in range(num_layers):
            w = p[3 * l][...]                           # matmul_dtype, VMEM-resident
            gamma = p[3 * l + 1][...].astype(jnp.float32)
            beta = p[3 * l + 2][...].astype(jnp.float32)

            # Linear (bias=False under default config). MXU matmul, f32 accumulation.
            z = jnp.dot(h, w, preferred_element_type=jnp.float32)

            # LayerNorm(eps): f32 statistics, fused affine epilogue.
            mean = jnp.mean(z, axis=-1, keepdims=True)
            c = z - mean
            var = jnp.mean(c * c, axis=-1, keepdims=True)
            inv = lax.rsqrt(var + ln_eps) * gamma       # one scale per row*gamma
            z = c * inv + beta

            if l < num_layers - 1:
                z = z * jax.nn.sigmoid(z)               # SiLU (EUP), f32
                h = z.astype(matmul_dtype)              # single cast for next MXU layer
            else:
                h = z                                   # out_act = Identity

        out_ref[...] = h.astype(out_ref.dtype)

    return kernel


# --------------------------------------------------------------------------
# Wrapper
# --------------------------------------------------------------------------
def _vmem_budget_bytes():
    """Generation-aware scoped-VMEM budget with ~15% headroom."""
    try:
        phys = int(pltpu.get_tpu_info().vmem_capacity_bytes)
    except Exception:
        phys = 64 << 20                                 # conservative (v7x per-TC size)
    return int(phys * 0.85)


def _pick_tile_b(B, budget, param_bytes, row_bytes):
    """Largest batch tile fitting the VMEM budget, >= 2 steps/TC when B allows."""
    avail = max(budget - param_bytes - (4 << 20), 1 << 20)
    tb = min(int(avail // max(row_bytes, 1)), 2048, B)
    if tb >= B and B >= 64:
        tb = B // 4                                     # >=4 grid steps -> 2 per TC (v7x)
    tb = max((tb // 16) * 16, 8)                        # sublane-safe for f32 and bf16
    return min(tb, B)


def mlp_layernorm(x, params, *, ln_eps=LN_EPS, tile_b=None,
                  matmul_dtype=jnp.bfloat16):
    """Fused MLP_LayerNorm forward.

    params: list of (W, gamma, beta) per layer;
            W is (in_features, out_features) (i.e. torch weight.T),
            gamma/beta are (1, out_features) LayerNorm affine parameters.
    """
    B, H_in = x.shape
    num_layers = len(params)
    dims = [H_in] + [w.shape[1] for (w, _, _) in params]
    H_out = dims[-1]
    out_dtype = x.dtype
    mm_isz = jnp.dtype(matmul_dtype).itemsize
    out_isz = jnp.dtype(out_dtype).itemsize

    # Pre-cast x and weights in the wrapper: halves weight/x HBM bytes + VMEM residency
    # on the bf16 path and removes the per-grid-step in-kernel recast.
    x_mm = x.astype(matmul_dtype)
    flat_params = []
    for (w, g, b) in params:
        flat_params += [w.astype(matmul_dtype), g, b]
    param_bytes = sum(int(a.size) * a.dtype.itemsize for a in flat_params)

    budget = _vmem_budget_bytes()
    # TODO(synk): weight-streaming fallback (tile output-feature / K dim via
    # pltpu.emit_pipeline) when param_bytes alone approaches the VMEM budget
    # (hidden sizes >= ~4096 on v7x); not needed at these sizes.

    # Rough per-row VMEM need: double-buffered x/out tiles + live f32 intermediates.
    io_row = 2 * (H_in * mm_isz + H_out * out_isz)
    f32_row = 4 * 3 * max(dims)
    row_bytes = io_row + f32_row

    if tile_b is None:
        tile_b = _pick_tile_b(B, budget, param_bytes, row_bytes)
    tile_b = min(tile_b, B)
    assert tile_b == B or tile_b % 16 == 0, \
        "batch tile must be a multiple of 16 (or the full batch)"
    grid = (pl.cdiv(B, tile_b),)

    # --- Block specs -------------------------------------------------------
    in_specs = [pl.BlockSpec((tile_b, H_in), lambda i: (i, 0))]   # batch-tiled x
    # Grid-invariant params: whole-array, single-buffered VMEM residents.
    param_spec = pl.BlockSpec(memory_space=pltpu.MemorySpace.VMEM)
    in_specs += [param_spec] * (3 * num_layers)

    out_specs = pl.BlockSpec((tile_b, H_out), lambda i: (i, 0))
    out_shape = jax.ShapeDtypeStruct((B, H_out), out_dtype)

    # --- VMEM request + cost hint ------------------------------------------
    tile_io_bytes = tile_b * (H_in * mm_isz + H_out * out_isz)
    vmem_limit = int(min(budget,
                         max(param_bytes + 2 * tile_io_bytes
                             + tile_b * f32_row + (8 << 20), 16 << 20)))

    mm_flops = 2 * B * sum(dims[l] * dims[l + 1] for l in range(num_layers))
    ew_flops = 8 * B * sum(dims[1:])
    transcendentals = B * (sum(dims[1:-1]) + num_layers)   # SiLU sigmoids + rsqrt/row
    bytes_accessed = int(x_mm.size) * mm_isz + B * H_out * out_isz + param_bytes

    kernel = _make_mlp_layernorm_kernel(num_layers, ln_eps, matmul_dtype)

    return pl.pallas_call(
        kernel,
        out_shape=out_shape,
        grid=grid,
        in_specs=in_specs,
        out_specs=out_specs,
        compiler_params=pltpu.CompilerParams(
            dimension_semantics=("parallel",),           # megacore / v7x 2-TC sharding
            vmem_limit_bytes=vmem_limit),
        cost_estimate=pl.CostEstimate(
            flops=int(mm_flops + ew_flops),
            transcendentals=int(transcendentals),
            bytes_accessed=int(bytes_accessed)),
    )(x_mm, *flat_params)


# --------------------------------------------------------------------------
# Pure-JAX reference (same math, same matmul_dtype casts).
# --------------------------------------------------------------------------
def mlp_layernorm_reference(x, params, *, ln_eps=LN_EPS,
                            matmul_dtype=jnp.bfloat16):
    h = x.astype(matmul_dtype)
    n = len(params)
    for l, (w, g, b) in enumerate(params):
        z = jnp.dot(h, w.astype(matmul_dtype), preferred_element_type=jnp.float32)
        mean = jnp.mean(z, axis=-1, keepdims=True)
        c = z - mean
        var = jnp.mean(c * c, axis=-1, keepdims=True)
        z = c * (lax.rsqrt(var + ln_eps) * g.astype(jnp.float32)) \
            + b.astype(jnp.float32)
        if l < n - 1:
            z = z * jax.nn.sigmoid(z)
            h = z.astype(matmul_dtype)
        else:
            h = z
    return h.astype(x.dtype)


def make_params(key, dims, dtype=jnp.float32):
    """Deterministic synthetic parameter init (not a checkpoint load).

    # TODO(synk): reproduce the module's init_relu / last_init schemes exactly
    # (forward-pass semantics do not depend on the init).
    """
    params = []
    keys = jax.random.split(key, len(dims) - 1)
    for l in range(len(dims) - 1):
        d_in, d_out = dims[l], dims[l + 1]
        w = (jax.random.normal(keys[l], (d_in, d_out))
             * (1.0 / jnp.sqrt(jnp.float32(d_in)))).astype(dtype)
        gamma = jnp.ones((1, d_out), dtype)      # LayerNorm weight
        beta = jnp.zeros((1, d_out), dtype)      # LayerNorm bias
        params.append((w, gamma, beta))
    return params


if __name__ == "__main__":
    key = jax.random.PRNGKey(0)
    kx, kp1, kp2 = jax.random.split(key, 3)

    # Small, lane-dense shapes (feature dims multiples of 128).
    B = 256
    x = jax.random.normal(kx, (B, 256), jnp.float32)

    # Config A — module defaults (layers=1): Linear(no bias) -> LayerNorm -> Identity.
    # f32 MXU path, explicit tile, compared at tight tolerance.
    params1 = make_params(kp1, [256, 256])
    out1 = jax.block_until_ready(
        mlp_layernorm(x, params1, tile_b=128, matmul_dtype=jnp.float32))
    ref1 = mlp_layernorm_reference(x, params1, matmul_dtype=jnp.float32)
    assert out1.shape == (B, 256)
    assert jnp.allclose(out1, ref1, atol=1e-4, rtol=1e-4)

    # Config B — layers=2: Linear -> LN -> SiLU -> Linear -> LN -> Identity.
    # Default bf16 MXU path (v6e/v7x fast path), auto tile_b, f32 LN statistics.
    params2 = make_params(kp2, [256, 256, 128])
    out2 = jax.block_until_ready(mlp_layernorm(x, params2))
    ref2 = mlp_layernorm_reference(x, params2)
    assert out2.shape == (B, 128)
    assert jnp.allclose(out2, ref2, atol=2e-2, rtol=2e-2)

    # Same config on the f32 path for a tight-tolerance cross-check.
    out2_f32 = jax.block_until_ready(
        mlp_layernorm(x, params2, matmul_dtype=jnp.float32))
    ref2_f32 = mlp_layernorm_reference(x, params2, matmul_dtype=jnp.float32)
    assert jnp.allclose(out2_f32, ref2_f32, atol=1e-4, rtol=1e-4)

    print("KERNEL_OK")
</pallas_src>

<mosaic_0001>
module attributes {stable_mosaic.version = 11 : i64} {
  func.func @kernel(%arg0: i32, %arg1: memref<128x256xf32, #tpu.memory_space<vmem>>, %arg2: memref<256x256xf32, #tpu.memory_space<vmem>>, %arg3: memref<1x256xf32, #tpu.memory_space<vmem>>, %arg4: memref<1x256xf32, #tpu.memory_space<vmem>>, %arg5: memref<128x256xf32, #tpu.memory_space<vmem>>) attributes {dimension_semantics = [#tpu.dimension_semantics<parallel>], iteration_bounds = array<i64: 2>, scalar_prefetch = 0 : i64, scratch_operands = 0 : i64, tpu.core_type = #tpu.core_type<tc>, window_params = [{transform_indices = @transform_0, window_bounds = array<i64: 128, 256>}, {pipeline_mode = #tpu.pipeline_mode<synchronous>, transform_indices = @transform_1, window_bounds = array<i64: 256, 256>}, {pipeline_mode = #tpu.pipeline_mode<synchronous>, transform_indices = @transform_2, window_bounds = array<i64: 1, 256>}, {pipeline_mode = #tpu.pipeline_mode<synchronous>, transform_indices = @transform_3, window_bounds = array<i64: 1, 256>}, {transform_indices = @transform_4, window_bounds = array<i64: 128, 256>}]} {
    %c0 = arith.constant 0 : index
    %c0_0 = arith.constant 0 : index
    %0 = vector.load %arg1[%c0, %c0_0] : memref<128x256xf32, #tpu.memory_space<vmem>>, vector<128x256xf32>
    %c0_1 = arith.constant 0 : index
    %c0_2 = arith.constant 0 : index
    %1 = vector.load %arg2[%c0_1, %c0_2] : memref<256x256xf32, #tpu.memory_space<vmem>>, vector<256x256xf32>
    %c0_3 = arith.constant 0 : index
    %c0_4 = arith.constant 0 : index
    %2 = vector.load %arg3[%c0_3, %c0_4] : memref<1x256xf32, #tpu.memory_space<vmem>>, vector<1x256xf32>
    %c0_5 = arith.constant 0 : index
    %c0_6 = arith.constant 0 : index
    %3 = vector.load %arg4[%c0_5, %c0_6] : memref<1x256xf32, #tpu.memory_space<vmem>>, vector<1x256xf32>
    %cst = arith.constant dense<0.000000e+00> : vector<128x256xf32>
    %4 = tpu.matmul %0, %1, %cst {dimension_numbers = #tpu.dot_dimension_numbers<[1], [0], [0], [1], [0, 0, 1, 1], [], []>} : vector<128x256xf32>, vector<256x256xf32>, vector<128x256xf32> -> vector<128x256xf32>
    %cst_7 = arith.constant dense<0.000000e+00> : vector<128xf32>
    %5 = vector.multi_reduction <add>, %4, %cst_7 [1] : vector<128x256xf32> to vector<128xf32>
    %6 = vector.shape_cast %5 : vector<128xf32> to vector<128x1xf32>
    %cst_8 = arith.constant 2.560000e+02 : f32
    %7 = vector.broadcast %cst_8 : f32 to vector<128x1xf32>
    %8 = arith.divf %6, %7 : vector<128x1xf32>
    %9 = vector.broadcast %8 : vector<128x1xf32> to vector<128x256xf32>
    %10 = arith.subf %4, %9 : vector<128x256xf32>
    %11 = arith.mulf %10, %10 : vector<128x256xf32>
    %cst_9 = arith.constant dense<0.000000e+00> : vector<128xf32>
    %12 = vector.multi_reduction <add>, %11, %cst_9 [1] : vector<128x256xf32> to vector<128xf32>
    %13 = vector.shape_cast %12 : vector<128xf32> to vector<128x1xf32>
    %cst_10 = arith.constant 2.560000e+02 : f32
    %14 = vector.broadcast %cst_10 : f32 to vector<128x1xf32>
    %15 = arith.divf %13, %14 : vector<128x1xf32>
    %cst_11 = arith.constant 1.000000e-03 : f32
    %16 = vector.broadcast %cst_11 : f32 to vector<128x1xf32>
    %17 = arith.addf %15, %16 : vector<128x1xf32>
    %18 = math.rsqrt %17 : vector<128x1xf32>
    %19 = vector.broadcast %18 : vector<128x1xf32> to vector<128x256xf32>
    %20 = vector.broadcast %2 : vector<1x256xf32> to vector<128x256xf32>
    %21 = arith.mulf %19, %20 : vector<128x256xf32>
    %22 = arith.mulf %10, %21 : vector<128x256xf32>
    %23 = vector.broadcast %3 : vector<1x256xf32> to vector<128x256xf32>
    %24 = arith.addf %22, %23 : vector<128x256xf32>
    %c0_12 = arith.constant 0 : index
    %c0_13 = arith.constant 0 : index
    %25 = vector.load %arg5[%c0_12, %c0_13] : memref<128x256xf32, #tpu.memory_space<vmem>>, vector<128x256xf32>
    tpu.vector_store %arg5[%c0_12, %c0_13], %24 {strides = array<i32>} : memref<128x256xf32, #tpu.memory_space<vmem>>, vector<128x256xf32>,
    return
  }
  func.func @transform_0(%arg0: i32) -> (i32, i32) {
    %c0_i32 = arith.constant 0 : i32
    %c0_i32_0 = arith.constant 0 : i32
    return %arg0, %c0_i32 : i32, i32
  }
  func.func @transform_1(%arg0: i32) -> (i32, i32) {
    %c0_i32 = arith.constant 0 : i32
    %c0_i32_0 = arith.constant 0 : i32
    %c0_i32_1 = arith.constant 0 : i32
    return %c0_i32, %c0_i32_0 : i32, i32
  }
  func.func @transform_2(%arg0: i32) -> (i32, i32) {
    %c0_i32 = arith.constant 0 : i32
    %c0_i32_0 = arith.constant 0 : i32
    %c0_i32_1 = arith.constant 0 : i32
    return %c0_i32, %c0_i32_0 : i32, i32
  }
  func.func @transform_3(%arg0: i32) -> (i32, i32) {
    %c0_i32 = arith.constant 0 : i32
    %c0_i32_0 = arith.constant 0 : i32
    %c0_i32_1 = arith.constant 0 : i32
    return %c0_i32, %c0_i32_0 : i32, i32
  }
  func.func @transform_4(%arg0: i32) -> (i32, i32) {
    %c0_i32 = arith.constant 0 : i32
    %c0_i32_0 = arith.constant 0 : i32
    return %arg0, %c0_i32 : i32, i32
  }
}

</mosaic_0001>

<llo_original>
// kernel: tpu_custom_call.1
$region0: #{tpu_custom_call.1}
  #allocation0 [shape = 'u32[]', space=smem, size = 0x4, offset = 0x4, fixed_abs, tag = 'smem constant byte address 0x4 - core index']
  #allocation1 [shape = 'u32[144,128]{1,0:T(1,128)}', space=vmem, size = 0x12000, scoped, tag = 'internal scratch']
  %s0 = inlined_call_operand.hbm [shape: f32[256,256], index: 0, kind: input, shape index: {}]
  %s1 = inlined_call_operand.hbm [shape: f32[256,256], index: 1, kind: input, shape index: {}]
  %s2 = inlined_call_operand.vmem [shape: f32[1,256], index: 2, kind: input, shape index: {}]
  %s3 = inlined_call_operand.vmem [shape: f32[1,256], index: 3, kind: input, shape index: {}]
  %s4 = inlined_call_operand.hbm [shape: f32[256,256], index: 4, kind: output, shape index: {}]
  %s5 = sld [smem:[#allocation0]]
  $region57: #{tpu_custom_call.1} parent=0
    _
  %s7 = ssub.s32 1, %s5
  %s8 = scalar_select 0, %s7, %s5
  $region1: #{tpu_custom_call.1} parent=0
    #allocation2 [shape = 'u8[262144]{0}', space=vmem, size = 0x40000, scoped, tag = 'input window, operand 0']
    #allocation3 [shape = 's32[2]{0}', space=sflag, size = 0x8, scoped, tag = 'scoped memory for tpu_custom_call.1']
    #allocation4 [shape = 's32[2]{0}', space=sflag, size = 0x8, scoped, tag = 'scoped memory for tpu_custom_call.1']
    #allocation5 [shape = 'u8[262144]{0}', space=vmem, size = 0x40000, scoped, tag = 'input window, operand 1, single buffered']
    #allocation6 [shape = 's32[1]{0}', space=sflag, size = 0x4, scoped, tag = 'scoped memory for tpu_custom_call.1']
    #allocation7 [shape = 'u8[262144]{0}', space=vmem, size = 0x40000, scoped, tag = 'output window, operand 0']
    %9 = vsyncpa [#allocation3], 0
    %s10 = scalar_lea.sflag [#allocation3], 1
    %11 = vsyncpa %s10, 0
    %12 = vsyncpa [#allocation6], 0
    %13 = vsyncpa [#allocation4], 0
    %s14 = scalar_lea.sflag [#allocation4], 1
    %15 = vsyncpa %s14, 0
    loop: start=0, step=1, limit=4
    $region2: #{tpu_custom_call.1} parent=1 // loop_pre_header
      _
    $region3: #{tpu_custom_call.1} parent=1 // loop_header
      %s17 = sphi 0, %s21
      %p18 = scmp.ge.s32.totalorder %s17, 4
      %s27 = sphi 0, %s29
      %s30 = sphi 0, %s27
      %s31 = sphi 0, %s30
      %s47 = sphi 0, %s31
      %s51 = sphi 0, %s51
      %s53 = sphi 0, %s51
      %s54 = sphi 0, %s53
      %s68 = sphi 0, %s54
      %s72 = sphi 0, %s72
      %s74 = sphi 0, %s72
      %s75 = sphi 0, %s74
      %s89 = sphi 0, %s75
      %s93 = sphi 0, %s93
      %s95 = sphi 0, %s93
      %s96 = sphi 0, %s95
      %s110 = sphi 0, %s96
      %s116 = sphi 0, %s118
      %s119 = sphi 0, %s116
      %s120 = sphi 0, %s119
      %s136 = sphi 0, %s120
    $region4: #{tpu_custom_call.1} parent=1 // loop_header_branch
      %20 = sbr.rel (%p18) target = $region8
    $region5: #{tpu_custom_call.1} parent=1 // loop_body
      %s22 = ssub.s32 %s17, 1
      %s23 = ssub.s32 %s17, 2
      %s24 = sadd.s32 %s17, 1
      %s25 = ssub.s32 %s17, %s24
      %p26 = scmp.eq.s32.totalorder %s25, 0
      %s28 = sadd.s32 %s27, 1
      %s29 = scalar_select %p26, %s27, %s28
      %p32 = pneg %p26
      %p33 = scmp.eq.s32.totalorder %s17, 1
      %p34 = por %p32, %p33
      %p35 = scmp.ne.s32.totalorder %s27, %s30
      %p36 = scmp.eq.s32.totalorder %s17, 0
      %p37 = por %p35, %p36
      %p38 = scmp.ne.s32.totalorder %s27, %s30
      %p39 = scmp.eq.s32.totalorder %s22, 1
      %p40 = por %p38, %p39
      %p41 = scmp.ne.s32.totalorder %s30, %s31
      %p42 = scmp.eq.s32.totalorder %s22, 0
      %p43 = por %p41, %p42
      %p44 = scmp.ne.s32.totalorder %s30, %s31
      %p45 = scmp.eq.s32.totalorder %s23, 1
      %p46 = por %p44, %p45
      %p48 = scmp.ne.s32.totalorder %s31, %s47
      %p49 = scmp.eq.s32.totalorder %s23, 0
      %p50 = por %p48, %p49
      %s52 = sadd.s32 %s51, 1
      %p55 = scmp.eq.s32.totalorder %s17, 1
      %p56 = scmp.ne.s32.totalorder %s51, %s53
      %p57 = scmp.eq.s32.totalorder %s17, 0
      %p58 = por %p56, %p57
      %p59 = scmp.ne.s32.totalorder %s51, %s53
      %p60 = scmp.eq.s32.totalorder %s22, 1
      %p61 = por %p59, %p60
      %p62 = scmp.ne.s32.totalorder %s53, %s54
      %p63 = scmp.eq.s32.totalorder %s22, 0
      %p64 = por %p62, %p63
      %p65 = scmp.ne.s32.totalorder %s53, %s54
      %p66 = scmp.eq.s32.totalorder %s23, 1
      %p67 = por %p65, %p66
      %p69 = scmp.ne.s32.totalorder %s54, %s68
      %p70 = scmp.eq.s32.totalorder %s23, 0
      %p71 = por %p69, %p70
      %s73 = sadd.s32 %s72, 1
      %p76 = scmp.eq.s32.totalorder %s17, 1
      %p77 = scmp.ne.s32.totalorder %s72, %s74
      %p78 = scmp.eq.s32.totalorder %s17, 0
      %p79 = por %p77, %p78
      %p80 = scmp.ne.s32.totalorder %s72, %s74
      %p81 = scmp.eq.s32.totalorder %s22, 1
      %p82 = por %p80, %p81
      %p83 = scmp.ne.s32.totalorder %s74, %s75
      %p84 = scmp.eq.s32.totalorder %s22, 0
      %p85 = por %p83, %p84
      %p86 = scmp.ne.s32.totalorder %s74, %s75
      %p87 = scmp.eq.s32.totalorder %s23, 1
      %p88 = por %p86, %p87
      %p90 = scmp.ne.s32.totalorder %s75, %s89
      %p91 = scmp.eq.s32.totalorder %s23, 0
      %p92 = por %p90, %p91
      %s94 = sadd.s32 %s93, 1
      %p97 = scmp.eq.s32.totalorder %s17, 1
      %p98 = scmp.ne.s32.totalorder %s93, %s95
      %p99 = scmp.eq.s32.totalorder %s17, 0
      %p100 = por %p98, %p99
      %p101 = scmp.ne.s32.totalorder %s93, %s95
      %p102 = scmp.eq.s32.totalorder %s22, 1
      %p103 = por %p101, %p102
      %p104 = scmp.ne.s32.totalorder %s95, %s96
      %p105 = scmp.eq.s32.totalorder %s22, 0
      %p106 = por %p104, %p105
      %p107 = scmp.ne.s32.totalorder %s95, %s96
      %p108 = scmp.eq.s32.totalorder %s23, 1
      %p109 = por %p107, %p108
      %p111 = scmp.ne.s32.totalorder %s96, %s110
      %p112 = scmp.eq.s32.totalorder %s23, 0
      %p113 = por %p111, %p112
      %s114 = ssub.s32 %s17, %s24
      %p115 = scmp.eq.s32.totalorder %s114, 0
      %s117 = sadd.s32 %s116, 1
      %s118 = scalar_select %p115, %s116, %s117
      %p121 = pneg %p115
      %p122 = scmp.eq.s32.totalorder %s17, 1
      %p123 = por %p121, %p122
      %p124 = scmp.ne.s32.totalorder %s116, %s119
      %p125 = scmp.eq.s32.totalorder %s17, 0
      %p126 = por %p124, %p125
      %p127 = scmp.ne.s32.totalorder %s116, %s119
      %p128 = scmp.eq.s32.totalorder %s22, 1
      %p129 = por %p127, %p128
      %p130 = scmp.ne.s32.totalorder %s119, %s120
      %p131 = scmp.eq.s32.totalorder %s22, 0
      %p132 = por %p130, %p131
      %p133 = scmp.ne.s32.totalorder %s119, %s120
      %p134 = scmp.eq.s32.totalorder %s23, 1
      %p135 = por %p133, %p134
      %p137 = scmp.ne.s32.totalorder %s120, %s136
      %p138 = scmp.eq.s32.totalorder %s23, 0
      %p139 = por %p137, %p138
      %p140 = scmp.le.s32.totalorder 1, %s17
      %p141 = scmp.lt.s32.totalorder %s17, 3
      %p142 = pnand %p140, %p141
      %p143 = pneg %p142
      // Predicated region
      $region9: #{tpu_custom_call.1} parent=5 // pred_check
        _
      $region10: #{tpu_custom_call.1} parent=5 // pred_check_branch
        %145 = sbr.rel (%p142) target = $region12
      $region11: #{tpu_custom_call.1} parent=5 // pred_region
        %s146 = ssub.s32 %s17, 1
        // Predicated region
        $region13: #{tpu_custom_call.1} parent=11 // pred_check
          %p147 = pneg %p64
        $region14: #{tpu_custom_call.1} parent=11 // pred_check_branch
          %149 = sbr.rel (%p147) target = $region16
        $region15: #{tpu_custom_call.1} parent=11 // pred_region
          %s151 = ssub.s32 8192, 8192
          %152 = vsyncadd [#allocation6], %s151
          %s153 = sshll.u32 [#allocation5], 4
          %s154 = int_to_ptr.vmem [resolvable:$true] %s153
          %159 = dma.hbm_to_vmem [thread:$0]  %s1, 8192, %s154, [#allocation6], 256, 256, 16
        $region16: #{tpu_custom_call.1} parent=11 // pred_fallthru
          _
        // Predicated region
        $region17: #{tpu_custom_call.1} parent=11 // pred_check
          %p160 = pneg %p85
        $region18: #{tpu_custom_call.1} parent=11 // pred_check_branch
          %162 = sbr.rel (%p160) target = $region20
        $region19: #{tpu_custom_call.1} parent=11 // pred_region
          _
        $region20: #{tpu_custom_call.1} parent=11 // pred_fallthru
          _
        // Predicated region
        $region21: #{tpu_custom_call.1} parent=11 // pred_check
          %p163 = pneg %p106
        $region22: #{tpu_custom_call.1} parent=11 // pred_check_branch
          %165 = sbr.rel (%p163) target = $region24
        $region23: #{tpu_custom_call.1} parent=11 // pred_region
          _
        $region24: #{tpu_custom_call.1} parent=11 // pred_fallthru
          _
      $region12: #{tpu_custom_call.1} parent=5 // pred_fallthru
        _
      %p166 = scmp.lt.s32.totalorder %s17, 2
      // Predicated region
      $region25: #{tpu_custom_call.1} parent=5 // pred_check
        %p167 = pneg %p166
      $region26: #{tpu_custom_call.1} parent=5 // pred_check_branch
        %169 = sbr.rel (%p167) target = $region28
      $region27: #{tpu_custom_call.1} parent=5 // pred_region
        // Predicated region
        $region29: #{tpu_custom_call.1} parent=27 // pred_check
          %p170 = pneg %p37
        $region30: #{tpu_custom_call.1} parent=27 // pred_check_branch
          %172 = sbr.rel (%p170) target = $region32
        $region31: #{tpu_custom_call.1} parent=27 // pred_region
          %s173 = sand.u32 %s27, 1
          %s174 = scalar_lea.sflag [#allocation3], %s173
          %s175 = sand.u32 %s27, 1
          %s176 = smul.addr %s175, 256
          %s177 = scalar_lea.vmem [#allocation2], %s176
          %s178 = smul.u32 16, %s17
          %s180 = ssub.s32 4096, 4096
          %181 = vsyncadd %s174, %s180
          %s182 = smul.addr %s178, 2
          %s183 = smul.addr %s182, 128
          %s184 = scalar_lea.hbm %s0, %s183
          %s185 = sshll.u32 %s177, 4
          %s186 = int_to_ptr.vmem [resolvable:$true] %s185
          %191 = dma.hbm_to_vmem [thread:$0]  %s184, 4096, %s186, %s174, 256, 256, 16
        $region32: #{tpu_custom_call.1} parent=27 // pred_fallthru
          _
      $region28: #{tpu_custom_call.1} parent=5 // pred_fallthru
        _
      %p192 = scmp.le.s32.totalorder 1, %s17
      %p193 = scmp.lt.s32.totalorder %s17, 3
      %p194 = pnand %p192, %p193
      %p195 = pneg %p194
      // Predicated region
      $region33: #{tpu_custom_call.1} parent=5 // pred_check
        _
      $region34: #{tpu_custom_call.1} parent=5 // pred_check_branch
        %197 = sbr.rel (%p194) target = $region36
      $region35: #{tpu_custom_call.1} parent=5 // pred_region
        %s198 = ssub.s32 %s17, 1
        %s199 = sand.u32 %s30, 1
        %s200 = scalar_lea.sflag [#allocation3], %s199
        %s201 = sand.u32 %s30, 1
        %s202 = smul.addr %s201, 256
        %s203 = scalar_lea.vmem [#allocation2], %s202
        // Predicated region
        $region37: #{tpu_custom_call.1} parent=35 // pred_check
          %p204 = pneg %p43
        $region38: #{tpu_custom_call.1} parent=35 // pred_check_branch
          %206 = sbr.rel (%p204) target = $region40
        $region39: #{tpu_custom_call.1} parent=35 // pred_region
          %207 = dma.done %s200, 4096
        $region40: #{tpu_custom_call.1} parent=35 // pred_fallthru
          _
        // Predicated region
        $region41: #{tpu_custom_call.1} parent=35 // pred_check
          %p208 = pneg %p64
        $region42: #{tpu_custom_call.1} parent=35 // pred_check_branch
          %210 = sbr.rel (%p208) target = $region44
        $region43: #{tpu_custom_call.1} parent=35 // pred_region
          %211 = dma.done [#allocation6], 8192
        $region44: #{tpu_custom_call.1} parent=35 // pred_fallthru
          _
        %s212 = sand.u32 %s30, 1
        %s213 = scalar_lea.sflag [#allocation3], %s212
        %s214 = sand.u32 %s30, 1
        %s215 = smul.addr %s214, 256
        %s216 = scalar_lea.vmem [#allocation2], %s215
        %p217 = pneg %p43
        %p218 = pneg %p40
        %p219 = pneg %p64
        %p220 = pneg %p61
        %p221 = pneg %p85
        %p222 = pneg %p82
        %p223 = pneg %p106
        %p224 = pneg %p103
        %p225 = pneg %p132
        %p226 = pneg %p129
        %s227 = sand.u32 %s119, 1
        %s228 = scalar_lea.sflag [#allocation4], %s227
        %s229 = sand.u32 %s119, 1
        %s230 = smul.addr %s229, 256
        %s231 = scalar_lea.vmem [#allocation7], %s230
        %s232 = smul.u32 16, %s22
        %s233 = smul.u32 16, %s22
        %v234 = vld [vmem:[%s203] sm:$0xff]
        %v235 = vld [vmem:[%s203 + $0x8] sm:$0xff]
        %v236 = vld [vmem:[%s203 + $0x10] sm:$0xff]
        %v237 = vld [vmem:[%s203 + $0x18] sm:$0xff]
        %v238 = vld [vmem:[%s203 + $0x20] sm:$0xff]
        %v239 = vld [vmem:[%s203 + $0x28] sm:$0xff]
        %v240 = vld [vmem:[%s203 + $0x30] sm:$0xff]
        %v241 = vld [vmem:[%s203 + $0x38] sm:$0xff]
        %v242 = vld [vmem:[%s203 + $0x40] sm:$0xff]
        %v243 = vld [vmem:[%s203 + $0x48] sm:$0xff]
        %v244 = vld [vmem:[%s203 + $0x50] sm:$0xff]
        %v245 = vld [vmem:[%s203 + $0x58] sm:$0xff]
        %v246 = vld [vmem:[%s203 + $0x60] sm:$0xff]
        %v247 = vld [vmem:[%s203 + $0x68] sm:$0xff]
        %v248 = vld [vmem:[%s203 + $0x70] sm:$0xff]
        %v249 = vld [vmem:[%s203 + $0x78] sm:$0xff]
        %v250 = vld [vmem:[%s203 + $0x80] sm:$0xff]
        %v251 = vld [vmem:[%s203 + $0x88] sm:$0xff]
        %v252 = vld [vmem:[%s203 + $0x90] sm:$0xff]
        %v253 = vld [vmem:[%s203 + $0x98] sm:$0xff]
        %v254 = vld [vmem:[%s203 + $0xa0] sm:$0xff]
        %v255 = vld [vmem:[%s203 + $0xa8] sm:$0xff]
        %v256 = vld [vmem:[%s203 + $0xb0] sm:$0xff]
        %v257 = vld [vmem:[%s203 + $0xb8] sm:$0xff]
        %v258 = vld [vmem:[%s203 + $0xc0] sm:$0xff]
        %v259 = vld [vmem:[%s203 + $0xc8] sm:$0xff]
        %v260 = vld [vmem:[%s203 + $0xd0] sm:$0xff]
        %v261 = vld [vmem:[%s203 + $0xd8] sm:$0xff]
        %v262 = vld [vmem:[%s203 + $0xe0] sm:$0xff]
        %v263 = vld [vmem:[%s203 + $0xe8] sm:$0xff]
        %v264 = vld [vmem:[%s203 + $0xf0] sm:$0xff]
        %v265 = vld [vmem:[%s203 + $0xf8] sm:$0xff]
        %v266 = vld [vmem:[#allocation5] sm:$0xff]
        %v267 = vld [vmem:[#allocation5 + $0x8] sm:$0xff]
        %v268 = vld [vmem:[#allocation5 + $0x10] sm:$0xff]
        %v269 = vld [vmem:[#allocation5 + $0x18] sm:$0xff]
        %v270 = vld [vmem:[#allocation5 + $0x20] sm:$0xff]
        %v271 = vld [vmem:[#allocation5 + $0x28] sm:$0xff]
        %v272 = vld [vmem:[#allocation5 + $0x30] sm:$0xff]
        %v273 = vld [vmem:[#allocation5 + $0x38] sm:$0xff]
        %v274 = vld [vmem:[#allocation5 + $0x40] sm:$0xff]
        %v275 = vld [vmem:[#allocation5 + $0x48] sm:$0xff]
        %v276 = vld [vmem:[#allocation5 + $0x50] sm:$0xff]
        %v277 = vld [vmem:[#allocation5 + $0x58] sm:$0xff]
        %v278 = vld [vmem:[#allocation5 + $0x60] sm:$0xff]
        %v279 = vld [vmem:[#allocation5 + $0x68] sm:$0xff]
        %v280 = vld [vmem:[#allocation5 + $0x70] sm:$0xff]
        %v281 = vld [vmem:[#allocation5 + $0x78] sm:$0xff]
        %v282 = vld [vmem:[#allocation5 + $0x80] sm:$0xff]
        %v283 = vld [vmem:[#allocation5 + $0x88] sm:$0xff]
        %v284 = vld [vmem:[#allocation5 + $0x90] sm:$0xff]
        %v285 = vld [vmem:[#allocation5 + $0x98] sm:$0xff]
        %v286 = vld [vmem:[#allocation5 + $0xa0] sm:$0xff]
        %v287 = vld [vmem:[#allocation5 + $0xa8] sm:$0xff]
        %v288 = vld [vmem:[#allocation5 + $0xb0] sm:$0xff]
        %v289 = vld [vmem:[#allocation5 + $0xb8] sm:$0xff]
        %v290 = vld [vmem:[#allocation5 + $0xc0] sm:$0xff]
        %v291 = vld [vmem:[#allocation5 + $0xc8] sm:$0xff]
        %v292 = vld [vmem:[#allocation5 + $0xd0] sm:$0xff]
        %v293 = vld [vmem:[#allocation5 + $0xd8] sm:$0xff]
        %v294 = vld [vmem:[#allocation5 + $0xe0] sm:$0xff]
        %v295 = vld [vmem:[#allocation5 + $0xe8] sm:$0xff]
        %v296 = vld [vmem:[#allocation5 + $0xf0] sm:$0xff]
        %v297 = vld [vmem:[#allocation5 + $0xf8] sm:$0xff]
        %v298 = vld [vmem:[#allocation5 + $0x100] sm:$0xff]
        %v299 = vld [vmem:[#allocation5 + $0x108] sm:$0xff]
        %v300 = vld [vmem:[#allocation5 + $0x110] sm:$0xff]
        %v301 = vld [vmem:[#allocation5 + $0x118] sm:$0xff]
        %v302 = vld [vmem:[#allocation5 + $0x120] sm:$0xff]
        %v303 = vld [vmem:[#allocation5 + $0x128] sm:$0xff]
        %v304 = vld [vmem:[#allocation5 + $0x130] sm:$0xff]
        %v305 = vld [vmem:[#allocation5 + $0x138] sm:$0xff]
        %v306 = vld [vmem:[#allocation5 + $0x140] sm:$0xff]
        %v307 = vld [vmem:[#allocation5 + $0x148] sm:$0xff]
        %v308 = vld [vmem:[#allocation5 + $0x150] sm:$0xff]
        %v309 = vld [vmem:[#allocation5 + $0x158] sm:$0xff]
        %v310 = vld [vmem:[#allocation5 + $0x160] sm:$0xff]
        %v311 = vld [vmem:[#allocation5 + $0x168] sm:$0xff]
        %v312 = vld [vmem:[#allocation5 + $0x170] sm:$0xff]
        %v313 = vld [vmem:[#allocation5 + $0x178] sm:$0xff]
        %v314 = vld [vmem:[#allocation5 + $0x180] sm:$0xff]
        %v315 = vld [vmem:[#allocation5 + $0x188] sm:$0xff]
        %v316 = vld [vmem:[#allocation5 + $0x190] sm:$0xff]
        %v317 = vld [vmem:[#allocation5 + $0x198] sm:$0xff]
        %v318 = vld [vmem:[#allocation5 + $0x1a0] sm:$0xff]
        %v319 = vld [vmem:[#allocation5 + $0x1a8] sm:$0xff]
        %v320 = vld [vmem:[#allocation5 + $0x1b0] sm:$0xff]
        %v321 = vld [vmem:[#allocation5 + $0x1b8] sm:$0xff]
        %v322 = vld [vmem:[#allocation5 + $0x1c0] sm:$0xff]
        %v323 = vld [vmem:[#allocation5 + $0x1c8] sm:$0xff]
        %v324 = vld [vmem:[#allocation5 + $0x1d0] sm:$0xff]
        %v325 = vld [vmem:[#allocation5 + $0x1d8] sm:$0xff]
        %v326 = vld [vmem:[#allocation5 + $0x1e0] sm:$0xff]
        %v327 = vld [vmem:[#allocation5 + $0x1e8] sm:$0xff]
        %v328 = vld [vmem:[#allocation5 + $0x1f0] sm:$0xff]
        %v329 = vld [vmem:[#allocation5 + $0x1f8] sm:$0xff]
        %v330 = vld [vmem:[%s2] sm:$0x3]
        %v331 = vld [vmem:[%s3] sm:$0x3]
        %332 = vmatprep.subr.mxu0 %v297
        %333 = vmatpush1.msra.mxu0 %v296
        %334 = vmatprep.subr.mxu0 %v295
        %335 = vmatpush1.msra.mxu0 %v294
        %336 = vmatprep.subr.mxu0 %v293
        %337 = vmatpush1.msra.mxu0 %v292
        %338 = vmatprep.subr.mxu0 %v291
        %339 = vmatpush1.msra.mxu0 %v290
        %340 = vmatprep.subr.mxu0 %v289
        %341 = vmatpush1.msra.mxu0 %v288
        %342 = vmatprep.subr.mxu0 %v287
        %343 = vmatpush1.msra.mxu0 %v286
        %344 = vmatprep.subr.mxu0 %v285
        %345 = vmatpush1.msra.mxu0 %v284
        %346 = vmatprep.subr.mxu0 %v283
        %347 = vmatpush1.msra.mxu0 %v282
        %348 = vmatprep.subr.mxu0 %v281
        %349 = vmatpush1.msra.mxu0 %v280
        %350 = vmatprep.subr.mxu0 %v279
        %351 = vmatpush1.msra.mxu0 %v278
        %352 = vmatprep.subr.mxu0 %v277
        %353 = vmatpush1.msra.mxu0 %v276
        %354 = vmatprep.subr.mxu0 %v275
        %355 = vmatpush1.msra.mxu0 %v274
        %356 = vmatprep.subr.mxu0 %v273
        %357 = vmatpush1.msra.mxu0 %v272
        %358 = vmatprep.subr.mxu0 %v271
        %359 = vmatpush1.msra.mxu0 %v270
        %360 = vmatprep.subr.mxu0 %v269
        %361 = vmatpush1.msra.mxu0 %v268
        %362 = vmatprep.subr.mxu0 %v267
        %363 = vmatpush1.msra.mxu0 %v266
        %364 = vmatprep.subr.mxu0 %v329
        %365 = vmatpush2.msra.mxu0 %v328
        %366 = vmatprep.subr.mxu0 %v327
        %367 = vmatpush2.msra.mxu0 %v326
        %368 = vmatprep.subr.mxu0 %v325
        %369 = vmatpush2.msra.mxu0 %v324
        %370 = vmatprep.subr.mxu0 %v323
        %371 = vmatpush2.msra.mxu0 %v322
        %372 = vmatprep.subr.mxu0 %v321
        %373 = vmatpush2.msra.mxu0 %v320
        %374 = vmatprep.subr.mxu0 %v319
        %375 = vmatpush2.msra.mxu0 %v318
        %376 = vmatprep.subr.mxu0 %v317
        %377 = vmatpush2.msra.mxu0 %v316
        %378 = vmatprep.subr.mxu0 %v315
        %379 = vmatpush2.msra.mxu0 %v314
        %380 = vmatprep.subr.mxu0 %v313
        %381 = vmatpush2.msra.mxu0 %v312
        %382 = vmatprep.subr.mxu0 %v311
        %383 = vmatpush2.msra.mxu0 %v310
        %384 = vmatprep.subr.mxu0 %v309
        %385 = vmatpush2.msra.mxu0 %v308
        %386 = vmatprep.subr.mxu0 %v307
        %387 = vmatpush2.msra.mxu0 %v306
        %388 = vmatprep.subr.mxu0 %v305
        %389 = vmatpush2.msra.mxu0 %v304
        %390 = vmatprep.subr.mxu0 %v303
        %391 = vmatpush2.msra.mxu0 %v302
        %392 = vmatprep.subr.mxu0 %v301
        %393 = vmatpush2.msra.mxu0 %v300
        %394 = vmatprep.subr.mxu0 %v299
        %395 = vmatpush2.msra.mxu0 %v298
        %396 = vmatprep.mubr.f32.mxu0 %v235
        %397 = vmatmul.mubr.f32.gmra.mxu0 %v234
        %v398 = vpop.f32.mrf.mxu0
        %v399 = vadd.f32 0.0, %v398
        %v400 = vpop.f32.mrf.mxu0
        %v401 = vadd.f32 0.0, %v400
        %402 = vmatprep.mubr.f32.mxu0 %v237
        %403 = vmatmul.mubr.f32.gmra.mxu0 %v236
        %v404 = vpop.f32.mrf.mxu0
        %v405 = vadd.f32 0.0, %v404
        %v406 = vpop.f32.mrf.mxu0
        %v407 = vadd.f32 0.0, %v406
        %408 = vmatprep.mubr.f32.mxu0 %v239
        %409 = vmatmul.mubr.f32.gmra.mxu0 %v238
        %v410 = vpop.f32.mrf.mxu0
        %v411 = vadd.f32 0.0, %v410
        %v412 = vpop.f32.mrf.mxu0
        %v413 = vadd.f32 0.0, %v412
        %414 = vmatprep.mubr.f32.mxu0 %v241
        %415 = vmatmul.mubr.f32.gmra.mxu0 %v240
        %v416 = vpop.f32.mrf.mxu0
        %v417 = vadd.f32 0.0, %v416
        %v418 = vpop.f32.mrf.mxu0
        %v419 = vadd.f32 0.0, %v418
        %420 = vmatprep.mubr.f32.mxu0 %v243
        %421 = vmatmul.mubr.f32.gmra.mxu0 %v242
        %v422 = vpop.f32.mrf.mxu0
        %v423 = vadd.f32 0.0, %v422
        %v424 = vpop.f32.mrf.mxu0
        %v425 = vadd.f32 0.0, %v424
        %426 = vmatprep.mubr.f32.mxu0 %v245
        %427 = vmatmul.mubr.f32.gmra.mxu0 %v244
        %v428 = vpop.f32.mrf.mxu0
        %v429 = vadd.f32 0.0, %v428
        %v430 = vpop.f32.mrf.mxu0
        %v431 = vadd.f32 0.0, %v430
        %432 = vmatprep.mubr.f32.mxu0 %v247
        %433 = vmatmul.mubr.f32.gmra.mxu0 %v246
        %v434 = vpop.f32.mrf.mxu0
        %v435 = vadd.f32 0.0, %v434
        %v436 = vpop.f32.mrf.mxu0
        %v437 = vadd.f32 0.0, %v436
        %438 = vmatprep.mubr.f32.mxu0 %v249
        %439 = vmatmul.mubr.f32.gmra.mxu0 %v248
        %v440 = vpop.f32.mrf.mxu0
        %v441 = vadd.f32 0.0, %v440
        %v442 = vpop.f32.mrf.mxu0
        %v443 = vadd.f32 0.0, %v442
        %444 = vmatprep.mubr.f32.mxu0 %v251
        %445 = vmatmul.mubr.f32.gmra.mxu0 %v250
        %v446 = vpop.f32.mrf.mxu0
        %v447 = vadd.f32 0.0, %v446
        %v448 = vpop.f32.mrf.mxu0
        %v449 = vadd.f32 0.0, %v448
        %450 = vmatprep.mubr.f32.mxu0 %v253
        %451 = vmatmul.mubr.f32.gmra.mxu0 %v252
        %v452 = vpop.f32.mrf.mxu0
        %v453 = vadd.f32 0.0, %v452
        %v454 = vpop.f32.mrf.mxu0
        %v455 = vadd.f32 0.0, %v454
        %456 = vmatprep.mubr.f32.mxu0 %v255
        %457 = vmatmul.mubr.f32.gmra.mxu0 %v254
        %v458 = vpop.f32.mrf.mxu0
        %v459 = vadd.f32 0.0, %v458
        %v460 = vpop.f32.mrf.mxu0
        %v461 = vadd.f32 0.0, %v460
        %462 = vmatprep.mubr.f32.mxu0 %v257
        %463 = vmatmul.mubr.f32.gmra.mxu0 %v256
        %v464 = vpop.f32.mrf.mxu0
        %v465 = vadd.f32 0.0, %v464
        %v466 = vpop.f32.mrf.mxu0
        %v467 = vadd.f32 0.0, %v466
        %468 = vmatprep.mubr.f32.mxu0 %v259
        %469 = vmatmul.mubr.f32.gmra.mxu0 %v258
        %v470 = vpop.f32.mrf.mxu0
        %v471 = vadd.f32 0.0, %v470
        %v472 = vpop.f32.mrf.mxu0
        %v473 = vadd.f32 0.0, %v472
        %474 = vmatprep.mubr.f32.mxu0 %v261
        %475 = vmatmul.mubr.f32.gmra.mxu0 %v260
        %v476 = vpop.f32.mrf.mxu0
        %v477 = vadd.f32 0.0, %v476
        %v478 = vpop.f32.mrf.mxu0
        %v479 = vadd.f32 0.0, %v478
        %480 = vmatprep.mubr.f32.mxu0 %v263
        %481 = vmatmul.mubr.f32.gmra.mxu0 %v262
        %v482 = vpop.f32.mrf.mxu0
        %v483 = vadd.f32 0.0, %v482
        %v484 = vpop.f32.mrf.mxu0
        %v485 = vadd.f32 0.0, %v484
        %486 = vmatprep.mubr.f32.mxu0 %v265
        %487 = vmatmul.mubr.f32.gmra.mxu0 %v264
        %v488 = vpop.f32.mrf.mxu0
        %v489 = vadd.f32 0.0, %v488
        %v490 = vpop.f32.mrf.mxu0
        %v491 = vadd.f32 0.0, %v490
        %492 = vdwg.mxu0
        %v493 = vadd.f32 %v399, %v401
        %494 = vadd.xlane.f32.xlu0 %v493
        %v495 = vpop.xlane.xlu0 %494
        %v496 = vadd.f32 %v405, %v407
        %497 = vadd.xlane.f32.xlu0 %v496
        %v498 = vpop.xlane.xlu0 %497
        %v499 = vadd.f32 %v411, %v413
        %500 = vadd.xlane.f32.xlu0 %v499
        %v501 = vpop.xlane.xlu0 %500
        %v502 = vadd.f32 %v417, %v419
        %503 = vadd.xlane.f32.xlu0 %v502
        %v504 = vpop.xlane.xlu0 %503
        %v505 = vadd.f32 %v423, %v425
        %506 = vadd.xlane.f32.xlu0 %v505
        %v507 = vpop.xlane.xlu0 %506
        %v508 = vadd.f32 %v429, %v431
        %509 = vadd.xlane.f32.xlu0 %v508
        %v510 = vpop.xlane.xlu0 %509
        %v511 = vadd.f32 %v435, %v437
        %512 = vadd.xlane.f32.xlu0 %v511
        %v513 = vpop.xlane.xlu0 %512
        %v514 = vadd.f32 %v441, %v443
        %515 = vadd.xlane.f32.xlu0 %v514
        %v516 = vpop.xlane.xlu0 %515
        %v517 = vadd.f32 %v447, %v449
        %518 = vadd.xlane.f32.xlu0 %v517
        %v519 = vpop.xlane.xlu0 %518
        %v520 = vadd.f32 %v453, %v455
        %521 = vadd.xlane.f32.xlu0 %v520
        %v522 = vpop.xlane.xlu0 %521
        %v523 = vadd.f32 %v459, %v461
        %524 = vadd.xlane.f32.xlu0 %v523
        %v525 = vpop.xlane.xlu0 %524
        %v526 = vadd.f32 %v465, %v467
        %527 = vadd.xlane.f32.xlu0 %v526
        %v528 = vpop.xlane.xlu0 %527
        %v529 = vadd.f32 %v471, %v473
        %530 = vadd.xlane.f32.xlu0 %v529
        %v531 = vpop.xlane.xlu0 %530
        %v532 = vadd.f32 %v477, %v479
        %533 = vadd.xlane.f32.xlu0 %v532
        %v534 = vpop.xlane.xlu0 %533
        %v535 = vadd.f32 %v483, %v485
        %536 = vadd.xlane.f32.xlu0 %v535
        %v537 = vpop.xlane.xlu0 %536
        %v538 = vadd.f32 %v489, %v491
        %539 = vadd.xlane.f32.xlu0 %v538
        %v540 = vpop.xlane.xlu0 %539
        %v541 = vrcp.pop 256.0
        %v542 = vmul.f32 %v495, %v541
        %v543 = vmul.f32 %v498, %v541
        %v544 = vmul.f32 %v501, %v541
        %v545 = vmul.f32 %v504, %v541
        %v546 = vmul.f32 %v507, %v541
        %v547 = vmul.f32 %v510, %v541
        %v548 = vmul.f32 %v513, %v541
        %v549 = vmul.f32 %v516, %v541
        %v550 = vmul.f32 %v519, %v541
        %v551 = vmul.f32 %v522, %v541
        %v552 = vmul.f32 %v525, %v541
        %v553 = vmul.f32 %v528, %v541
        %v554 = vmul.f32 %v531, %v541
        %v555 = vmul.f32 %v534, %v541
        %v556 = vmul.f32 %v537, %v541
        %v557 = vmul.f32 %v540, %v541
        %v558 = vsub.f32 %v399, %v542
        %v559 = vsub.f32 %v401, %v542
        %v560 = vsub.f32 %v405, %v543
        %v561 = vsub.f32 %v407, %v543
        %v562 = vsub.f32 %v411, %v544
        %v563 = vsub.f32 %v413, %v544
        %v564 = vsub.f32 %v417, %v545
        %v565 = vsub.f32 %v419, %v545
        %v566 = vsub.f32 %v423, %v546
        %v567 = vsub.f32 %v425, %v546
        %v568 = vsub.f32 %v429, %v547
        %v569 = vsub.f32 %v431, %v547
        %v570 = vsub.f32 %v435, %v548
        %v571 = vsub.f32 %v437, %v548
        %v572 = vsub.f32 %v441, %v549
        %v573 = vsub.f32 %v443, %v549
        %v574 = vsub.f32 %v447, %v550
        %v575 = vsub.f32 %v449, %v550
        %v576 = vsub.f32 %v453, %v551
        %v577 = vsub.f32 %v455, %v551
        %v578 = vsub.f32 %v459, %v552
        %v579 = vsub.f32 %v461, %v552
        %v580 = vsub.f32 %v465, %v553
        %v581 = vsub.f32 %v467, %v553
        %v582 = vsub.f32 %v471, %v554
        %v583 = vsub.f32 %v473, %v554
        %v584 = vsub.f32 %v477, %v555
        %v585 = vsub.f32 %v479, %v555
        %v586 = vsub.f32 %v483, %v556
        %v587 = vsub.f32 %v485, %v556
        %v588 = vsub.f32 %v489, %v557
        %v589 = vsub.f32 %v491, %v557
        %v590 = vmul.f32 %v558, %v558
        %v591 = vmul.f32 %v559, %v559
        %v592 = vmul.f32 %v560, %v560
        %v593 = vmul.f32 %v561, %v561
        %v594 = vmul.f32 %v562, %v562
        %v595 = vmul.f32 %v563, %v563
        %v596 = vmul.f32 %v564, %v564
        %v597 = vmul.f32 %v565, %v565
        %v598 = vmul.f32 %v566, %v566
        %v599 = vmul.f32 %v567, %v567
        %v600 = vmul.f32 %v568, %v568
        %v601 = vmul.f32 %v569, %v569
        %v602 = vmul.f32 %v570, %v570
        %v603 = vmul.f32 %v571, %v571
        %v604 = vmul.f32 %v572, %v572
        %v605 = vmul.f32 %v573, %v573
        %v606 = vmul.f32 %v574, %v574
        %v607 = vmul.f32 %v575, %v575
        %v608 = vmul.f32 %v576, %v576
        %v609 = vmul.f32 %v577, %v577
        %v610 = vmul.f32 %v578, %v578
        %v611 = vmul.f32 %v579, %v579
        %v612 = vmul.f32 %v580, %v580
        %v613 = vmul.f32 %v581, %v581
        %v614 = vmul.f32 %v582, %v582
        %v615 = vmul.f32 %v583, %v583
        %v616 = vmul.f32 %v584, %v584
        %v617 = vmul.f32 %v585, %v585
        %v618 = vmul.f32 %v586, %v586
        %v619 = vmul.f32 %v587, %v587
        %v620 = vmul.f32 %v588, %v588
        %v621 = vmul.f32 %v589, %v589
        %v622 = vadd.f32 %v590, %v591
        %623 = vadd.xlane.f32.xlu0 %v622
        %v624 = vpop.xlane.xlu0 %623
        %v625 = vadd.f32 %v592, %v593
        %626 = vadd.xlane.f32.xlu0 %v625
        %v627 = vpop.xlane.xlu0 %626
        %v628 = vadd.f32 %v594, %v595
        %629 = vadd.xlane.f32.xlu0 %v628
        %v630 = vpop.xlane.xlu0 %629
        %v631 = vadd.f32 %v596, %v597
        %632 = vadd.xlane.f32.xlu0 %v631
        %v633 = vpop.xlane.xlu0 %632
        %v634 = vadd.f32 %v598, %v599
        %635 = vadd.xlane.f32.xlu0 %v634
        %v636 = vpop.xlane.xlu0 %635
        %v637 = vadd.f32 %v600, %v601
        %638 = vadd.xlane.f32.xlu0 %v637
        %v639 = vpop.xlane.xlu0 %638
        %v640 = vadd.f32 %v602, %v603
        %641 = vadd.xlane.f32.xlu0 %v640
        %v642 = vpop.xlane.xlu0 %641
        %v643 = vadd.f32 %v604, %v605
        %644 = vadd.xlane.f32.xlu0 %v643
        %v645 = vpop.xlane.xlu0 %644
        %v646 = vadd.f32 %v606, %v607
        %647 = vadd.xlane.f32.xlu0 %v646
        %v648 = vpop.xlane.xlu0 %647
        %v649 = vadd.f32 %v608, %v609
        %650 = vadd.xlane.f32.xlu0 %v649
        %v651 = vpop.xlane.xlu0 %650
        %v652 = vadd.f32 %v610, %v611
        %653 = vadd.xlane.f32.xlu0 %v652
        %v654 = vpop.xlane.xlu0 %653
        %v655 = vadd.f32 %v612, %v613
        %656 = vadd.xlane.f32.xlu0 %v655
        %v657 = vpop.xlane.xlu0 %656
        %v658 = vadd.f32 %v614, %v615
        %659 = vadd.xlane.f32.xlu0 %v658
        %v660 = vpop.xlane.xlu0 %659
        %v661 = vadd.f32 %v616, %v617
        %662 = vadd.xlane.f32.xlu0 %v661
        %v663 = vpop.xlane.xlu0 %662
        %v664 = vadd.f32 %v618, %v619
        %665 = vadd.xlane.f32.xlu0 %v664
        %v666 = vpop.xlane.xlu0 %665
        %v667 = vadd.f32 %v620, %v621
        %668 = vadd.xlane.f32.xlu0 %v667
        %v669 = vpop.xlane.xlu0 %668
        %v670 = vmul.f32 %v624, %v541
        %v671 = vmul.f32 %v627, %v541
        %v672 = vmul.f32 %v630, %v541
        %v673 = vmul.f32 %v633, %v541
        %v674 = vmul.f32 %v636, %v541
        %v675 = vmul.f32 %v639, %v541
        %v676 = vmul.f32 %v642, %v541
        %v677 = vmul.f32 %v645, %v541
        %v678 = vmul.f32 %v648, %v541
        %v679 = vmul.f32 %v651, %v541
        %v680 = vmul.f32 %v654, %v541
        %v681 = vmul.f32 %v657, %v541
        %v682 = vmul.f32 %v660, %v541
        %v683 = vmul.f32 %v663, %v541
        %v684 = vmul.f32 %v666, %v541
        %v685 = vmul.f32 %v669, %v541
        %v686 = vadd.f32 %v670, 0.001
        %v687 = vadd.f32 %v671, 0.001
        %v688 = vadd.f32 %v672, 0.001
        %v689 = vadd.f32 %v673, 0.001
        %v690 = vadd.f32 %v674, 0.001
        %v691 = vadd.f32 %v675, 0.001
        %v692 = vadd.f32 %v676, 0.001
        %v693 = vadd.f32 %v677, 0.001
        %v694 = vadd.f32 %v678, 0.001
        %v695 = vadd.f32 %v679, 0.001
        %v696 = vadd.f32 %v680, 0.001
        %v697 = vadd.f32 %v681, 0.001
        %v698 = vadd.f32 %v682, 0.001
        %v699 = vadd.f32 %v683, 0.001
        %v700 = vadd.f32 %v684, 0.001
        %v701 = vadd.f32 %v685, 0.001
        %v702 = vrsqrt.pop %v686
        %v703 = vrsqrt.pop %v687
        %v704 = vrsqrt.pop %v688
        %v705 = vrsqrt.pop %v689
        %v706 = vrsqrt.pop %v690
        %v707 = vrsqrt.pop %v691
        %v708 = vrsqrt.pop %v692
        %v709 = vrsqrt.pop %v693
        %v710 = vrsqrt.pop %v694
        %v711 = vrsqrt.pop %v695
        %v712 = vrsqrt.pop %v696
        %v713 = vrsqrt.pop %v697
        %v714 = vrsqrt.pop %v698
        %v715 = vrsqrt.pop %v699
        %v716 = vrsqrt.pop %v700
        %v717 = vrsqrt.pop %v701
        %v719 = vlaneseq
        %v720 = vshrl.u32 %v719, 7
        %v721 = vsub.s32 0, %v720
        %v722 = vrot.slane %v330, %v721
        %v723 = vlaneseq
        %v724 = vshrl.u32 %v723, 7
        %v725 = vsub.s32 1, %v724
        %v726 = vrot.slane %v330, %v725
        %v729 = vmul.f32 %v702, %v722
        %v730 = vmul.f32 %v702, %v726
        %v731 = vmul.f32 %v703, %v722
        %v732 = vmul.f32 %v703, %v726
        %v733 = vmul.f32 %v704, %v722
        %v734 = vmul.f32 %v704, %v726
        %v735 = vmul.f32 %v705, %v722
        %v736 = vmul.f32 %v705, %v726
        %v737 = vmul.f32 %v706, %v722
        %v738 = vmul.f32 %v706, %v726
        %v739 = vmul.f32 %v707, %v722
        %v740 = vmul.f32 %v707, %v726
        %v741 = vmul.f32 %v708, %v722
        %v742 = vmul.f32 %v708, %v726
        %v743 = vmul.f32 %v709, %v722
        %v744 = vmul.f32 %v709, %v726
        %v745 = vmul.f32 %v710, %v722
        %v746 = vmul.f32 %v710, %v726
        %v747 = vmul.f32 %v711, %v722
        %v748 = vmul.f32 %v711, %v726
        %v749 = vmul.f32 %v712, %v722
        %v750 = vmul.f32 %v712, %v726
        %v751 = vmul.f32 %v713, %v722
        %v752 = vmul.f32 %v713, %v726
        %v753 = vmul.f32 %v714, %v722
        %v754 = vmul.f32 %v714, %v726
        %v755 = vmul.f32 %v715, %v722
        %v756 = vmul.f32 %v715, %v726
        %v757 = vmul.f32 %v716, %v722
        %v758 = vmul.f32 %v716, %v726
        %v759 = vmul.f32 %v717, %v722
        %v760 = vmul.f32 %v717, %v726
        %v761 = vmul.f32 %v558, %v729
        %v762 = vmul.f32 %v559, %v730
        %v763 = vmul.f32 %v560, %v731
        %v764 = vmul.f32 %v561, %v732
        %v765 = vmul.f32 %v562, %v733
        %v766 = vmul.f32 %v563, %v734
        %v767 = vmul.f32 %v564, %v735
        %v768 = vmul.f32 %v565, %v736
        %v769 = vmul.f32 %v566, %v737
        %v770 = vmul.f32 %v567, %v738
        %v771 = vmul.f32 %v568, %v739
        %v772 = vmul.f32 %v569, %v740
        %v773 = vmul.f32 %v570, %v741
        %v774 = vmul.f32 %v571, %v742
        %v775 = vmul.f32 %v572, %v743
        %v776 = vmul.f32 %v573, %v744
        %v777 = vmul.f32 %v574, %v745
        %v778 = vmul.f32 %v575, %v746
        %v779 = vmul.f32 %v576, %v747
        %v780 = vmul.f32 %v577, %v748
        %v781 = vmul.f32 %v578, %v749
        %v782 = vmul.f32 %v579, %v750
        %v783 = vmul.f32 %v580, %v751
        %v784 = vmul.f32 %v581, %v752
        %v785 = vmul.f32 %v582, %v753
        %v786 = vmul.f32 %v583, %v754
        %v787 = vmul.f32 %v584, %v755
        %v788 = vmul.f32 %v585, %v756
        %v789 = vmul.f32 %v586, %v757
        %v790 = vmul.f32 %v587, %v758
        %v791 = vmul.f32 %v588, %v759
        %v792 = vmul.f32 %v589, %v760
        %v794 = vlaneseq
        %v795 = vshrl.u32 %v794, 7
        %v796 = vsub.s32 0, %v795
        %v797 = vrot.slane %v331, %v796
        %v798 = vlaneseq
        %v799 = vshrl.u32 %v798, 7
        %v800 = vsub.s32 1, %v799
        %v801 = vrot.slane %v331, %v800
        %v804 = vadd.f32 %v761, %v797
        %v805 = vadd.f32 %v762, %v801
        %v806 = vadd.f32 %v763, %v797
        %v807 = vadd.f32 %v764, %v801
        %v808 = vadd.f32 %v765, %v797
        %v809 = vadd.f32 %v766, %v801
        %v810 = vadd.f32 %v767, %v797
        %v811 = vadd.f32 %v768, %v801
        %v812 = vadd.f32 %v769, %v797
        %v813 = vadd.f32 %v770, %v801
        %v814 = vadd.f32 %v771, %v797
        %v815 = vadd.f32 %v772, %v801
        %v816 = vadd.f32 %v773, %v797
        %v817 = vadd.f32 %v774, %v801
        %v818 = vadd.f32 %v775, %v797
        %v819 = vadd.f32 %v776, %v801
        %v820 = vadd.f32 %v777, %v797
        %v821 = vadd.f32 %v778, %v801
        %v822 = vadd.f32 %v779, %v797
        %v823 = vadd.f32 %v780, %v801
        %v824 = vadd.f32 %v781, %v797
        %v825 = vadd.f32 %v782, %v801
        %v826 = vadd.f32 %v783, %v797
        %v827 = vadd.f32 %v784, %v801
        %v828 = vadd.f32 %v785, %v797
        %v829 = vadd.f32 %v786, %v801
        %v830 = vadd.f32 %v787, %v797
        %v831 = vadd.f32 %v788, %v801
        %v832 = vadd.f32 %v789, %v797
        %v833 = vadd.f32 %v790, %v801
        %v834 = vadd.f32 %v791, %v797
        %v835 = vadd.f32 %v792, %v801
        %836 = vst [vmem:[%s231] sm:$0xff] %v804
        %837 = vst [vmem:[%s231 + $0x8] sm:$0xff] %v805
        %838 = vst [vmem:[%s231 + $0x10] sm:$0xff] %v806
        %839 = vst [vmem:[%s231 + $0x18] sm:$0xff] %v807
        %840 = vst [vmem:[%s231 + $0x20] sm:$0xff] %v808
        %841 = vst [vmem:[%s231 + $0x28] sm:$0xff] %v809
        %842 = vst [vmem:[%s231 + $0x30] sm:$0xff] %v810
        %843 = vst [vmem:[%s231 + $0x38] sm:$0xff] %v811
        %844 = vst [vmem:[%s231 + $0x40] sm:$0xff] %v812
        %845 = vst [vmem:[%s231 + $0x48] sm:$0xff] %v813
        %846 = vst [vmem:[%s231 + $0x50] sm:$0xff] %v814
        %847 = vst [vmem:[%s231 + $0x58] sm:$0xff] %v815
        %848 = vst [vmem:[%s231 + $0x60] sm:$0xff] %v816
        %849 = vst [vmem:[%s231 + $0x68] sm:$0xff] %v817
        %850 = vst [vmem:[%s231 + $0x70] sm:$0xff] %v818
        %851 = vst [vmem:[%s231 + $0x78] sm:$0xff] %v819
        %852 = vst [vmem:[%s231 + $0x80] sm:$0xff] %v820
        %853 = vst [vmem:[%s231 + $0x88] sm:$0xff] %v821
        %854 = vst [vmem:[%s231 + $0x90] sm:$0xff] %v822
        %855 = vst [vmem:[%s231 + $0x98] sm:$0xff] %v823
        %856 = vst [vmem:[%s231 + $0xa0] sm:$0xff] %v824
        %857 = vst [vmem:[%s231 + $0xa8] sm:$0xff] %v825
        %858 = vst [vmem:[%s231 + $0xb0] sm:$0xff] %v826
        %859 = vst [vmem:[%s231 + $0xb8] sm:$0xff] %v827
        %860 = vst [vmem:[%s231 + $0xc0] sm:$0xff] %v828
        %861 = vst [vmem:[%s231 + $0xc8] sm:$0xff] %v829
        %862 = vst [vmem:[%s231 + $0xd0] sm:$0xff] %v830
        %863 = vst [vmem:[%s231 + $0xd8] sm:$0xff] %v831
        %864 = vst [vmem:[%s231 + $0xe0] sm:$0xff] %v832
        %865 = vst [vmem:[%s231 + $0xe8] sm:$0xff] %v833
        %866 = vst [vmem:[%s231 + $0xf0] sm:$0xff] %v834
        %867 = vst [vmem:[%s231 + $0xf8] sm:$0xff] %v835
        %s868 = sand.u32 %s119, 1
        %s869 = scalar_lea.sflag [#allocation4], %s868
        %s870 = sand.u32 %s119, 1
        %s871 = smul.addr %s870, 256
        %s872 = scalar_lea.vmem [#allocation7], %s871
        // Predicated region
        $region45: #{tpu_custom_call.1} parent=35 // pred_check
          %p873 = pneg %p129
        $region46: #{tpu_custom_call.1} parent=35 // pred_check_branch
          %875 = sbr.rel (%p873) target = $region48
        $region47: #{tpu_custom_call.1} parent=35 // pred_region
          %s876 = smul.u32 16, %s22
          %s878 = ssub.s32 4096, 4096
          %879 = vsyncadd %s869, %s878
          %s880 = smul.addr %s876, 2
          %s881 = smul.addr %s880, 128
          %s882 = scalar_lea.hbm %s4, %s881
          %s883 = sshll.u32 %s872, 4
          %s884 = int_to_ptr.vmem [resolvable:$true] %s883
          %889 = dma.vmem_to_hbm [thread:$0]  %s884, 4096, %s882, %s869, 256, 256, 16
        $region48: #{tpu_custom_call.1} parent=35 // pred_fallthru
          _
      $region36: #{tpu_custom_call.1} parent=5 // pred_fallthru
        _
      %p890 = scmp.le.s32.totalorder 2, %s17
      // Predicated region
      $region49: #{tpu_custom_call.1} parent=5 // pred_check
        %p891 = pneg %p890
      $region50: #{tpu_custom_call.1} parent=5 // pred_check_branch
        %893 = sbr.rel (%p891) target = $region52
      $region51: #{tpu_custom_call.1} parent=5 // pred_region
        %s894 = ssub.s32 %s17, 2
        // Predicated region
        $region53: #{tpu_custom_call.1} parent=51 // pred_check
          %p895 = pneg %p135
        $region54: #{tpu_custom_call.1} parent=51 // pred_check_branch
          %897 = sbr.rel (%p895) target = $region56
        $region55: #{tpu_custom_call.1} parent=51 // pred_region
          %s898 = sand.u32 %s120, 1
          %s899 = scalar_lea.sflag [#allocation4], %s898
          %s900 = sand.u32 %s120, 1
          %s901 = smul.addr %s900, 256
          %s902 = scalar_lea.vmem [#allocation7], %s901
          %903 = dma.done %s899, 4096
        $region56: #{tpu_custom_call.1} parent=51 // pred_fallthru
          _
      $region52: #{tpu_custom_call.1} parent=5 // pred_fallthru
        _
    $region6: #{tpu_custom_call.1} parent=1 // loop_footer
      %s21 = sadd.s32 1, %s17
    $region7: #{tpu_custom_call.1} parent=1 // loop_footer_branch
      %16 = sbr.rel target = $region3
    $region8: #{tpu_custom_call.1} parent=1 // loop_exit
      _
    %904 = vsyncpa [#allocation3], 1
    %s905 = scalar_lea.sflag [#allocation3], 1
    %906 = vsyncpa %s905, 1
    %907 = vsyncpa [#allocation6], 1
    %908 = vsyncpa [#allocation4], 1
    %s909 = scalar_lea.sflag [#allocation4], 1
    %910 = vsyncpa %s909, 1

</llo_original>
